<compile_context>
chip_gen: v7x
topology: tpu7x:2x2x1
jax: 0.10.0
libtpu: 0.0.40
codegen_flags: <defaults>
</compile_context>

<pallas_src>
import numpy as np
import jax
import jax.numpy as jnp
from jax.experimental import pallas as pl
from jax.experimental.pallas import tpu as pltpu

NEG_SLOPE = 0.01
BN_EPS = 1e-5
MATMUL_DTYPE = jnp.bfloat16   # MXU operand dtype (f32 accumulation); bf16-native on v6e/v7x.


def build_banded_weights(w_hwio, W_out, cin_pad):
    """(3,3,Cin,Cout) conv weights -> (3, W*cin_pad, W*Cout) banded matrices (bf16).

    bands[ky][j*cin_pad+ci, x*Cout+co] = w[ky, kx, ci, co] with kx = j - x + 1 (0..2),
    zero elsewhere: the band implements the kx taps AND the W-direction zero padding.
    TODO(synk): at realistic W the O(W^2*Cin*Cout) band should be W-striped and reused
    across a W grid axis instead of one dense (W*Cin, W*Cout) matrix per tap.
    """
    kh, kw, cin, cout = w_hwio.shape
    if cin_pad > cin:
        w_hwio = jnp.pad(w_hwio, ((0, 0), (0, 0), (0, cin_pad - cin), (0, 0)))
    bands = []
    for ky in range(kh):
        m = jnp.zeros((W_out, cin_pad, W_out, cout), jnp.float32)
        for kx in range(kw):
            xs = np.arange(W_out)
            js = xs + kx - 1
            ok = (js >= 0) & (js < W_out)
            xs, js = xs[ok], js[ok]
            m = m.at[js, :, xs, :].add(w_hwio[ky, kx].astype(jnp.float32))
        bands.append(m.reshape(W_out * cin_pad, W_out * cout))
    return jnp.stack(bands, axis=0).astype(MATMUL_DTYPE)


def make_fused_kernel(num_convs, N, H, W, Cout):
    """All blocks fused in one kernel; intermediates stay in vregs/VMEM as values."""
    NH, WCout = N * H, W * Cout

    def kernel(*refs):
        x_ref, gm_ref = refs[0], refs[1]
        blk_refs = refs[2:2 + 3 * num_convs]
        out_ref = refs[2 + 3 * num_convs]

        # Row masks for the H-direction halo, computed once and reused by every block:
        # global row r = n*H + h may take a contribution from the row above iff h > 0,
        # and from the row below iff h < H-1 (covers image borders AND sample boundaries).
        rows = jax.lax.broadcasted_iota(jnp.int32, (NH, WCout), 0)
        take_above = rows != 0
        take_below = rows != (H - 1)
        for n in range(1, N):
            take_above = jnp.logical_and(take_above, rows != n * H)
            take_below = jnp.logical_and(take_below, rows != (n * H + H - 1))
        zrow = jnp.zeros((1, WCout), jnp.float32)

        gm = gm_ref[...]                           # (WCout, WCout) f32, pre-scaled by 1/M

        lhs = x_ref[...]                           # (NH, W*Cin_pad) bf16, lane-dense
        for blk in range(num_convs):
            w_ref, g_ref, be_ref = blk_refs[3 * blk:3 * blk + 3]

            # 3x3 conv = 3 banded MXU matmuls (one per ky).  The ky offsets are applied
            # to the *results* via a 1-row shift + boundary mask: no padded scratch
            # slabs, no memsets, no misaligned per-ky LHS relayouts.
            y0 = jnp.dot(lhs, w_ref[0], preferred_element_type=jnp.float32)
            y1 = jnp.dot(lhs, w_ref[1], preferred_element_type=jnp.float32)
            y2 = jnp.dot(lhs, w_ref[2], preferred_element_type=jnp.float32)
            acc = y1
            acc = acc + jnp.where(take_above,
                                  jnp.concatenate([zrow, y0[:-1, :]], axis=0), 0.0)
            acc = acc + jnp.where(take_below,
                                  jnp.concatenate([y2[1:, :], zrow], axis=0), 0.0)
            # Conv bias intentionally omitted: a per-channel constant only shifts the
            # batch mean, so training-mode BatchNorm cancels it exactly.

            # TODO(synk): training-mode Dropout2d (p=0.5, per-(sample,channel)) is
            # stochastic; treated as identity (eval semantics).

            # BatchNorm2d batch statistics, single pass (sum & sum-of-squares); the two
            # per-channel aggregations + broadcast over W lane groups are ONE tiny matmul.
            stats = jnp.concatenate(
                [jnp.sum(acc, axis=0, keepdims=True),
                 jnp.sum(acc * acc, axis=0, keepdims=True)], axis=0)   # (2, WCout)
            agg = jnp.dot(stats, gm, preferred_element_type=jnp.float32)
            mean = agg[0:1, :]
            var = jnp.maximum(agg[1:2, :] - mean * mean, 0.0)          # clamp cancellation
            scale = jax.lax.rsqrt(var + BN_EPS) * g_ref[...]
            shift = be_ref[...] - mean * scale
            y = acc * scale + shift

            # LeakyReLU(0.01)
            y = jnp.maximum(y, NEG_SLOPE * y)

            if blk == num_convs - 1:
                out_ref[...] = y                    # lane-dense (NH, WCout) f32 store
            else:
                lhs = y.astype(MATMUL_DTYPE)        # next block's MXU LHS, stays on-core

    return kernel


def stacked_conv_layers_forward(x_nchw, params):
    """StackedConvLayers.forward: one fused Pallas call, returns (features_NCHW, kl_sum)."""
    N, Cin, H, W = x_nchw.shape
    Cout = params[0][0].shape[-1]
    num_convs = len(params)
    NH, WCout = N * H, W * Cout
    M = N * H * W

    # Pad Cin to a multiple of 8 so the first block's LHS is lane-dense
    # (W*cin_pad = 128 at these shapes -> full-lane unmasked loads, full-K MXU pass).
    cin_pad = -(-Cin // 8) * 8

    # Edge layout plumbing only: NCHW -> lane-dense (N*H, W*cin_pad) bf16 slab.
    x_nhwc = jnp.transpose(x_nchw, (0, 2, 3, 1))
    if cin_pad > Cin:
        x_nhwc = jnp.pad(x_nhwc, ((0, 0), (0, 0), (0, 0), (0, cin_pad - Cin)))
    x_slab = x_nhwc.reshape(NH, W * cin_pad).astype(MATMUL_DTYPE)

    # Channel-group selector (sums over the W lane groups, broadcasts back), pre-scaled 1/M.
    gm = jnp.tile(jnp.eye(Cout, dtype=jnp.float32), (W, W)) / float(M)

    flat_inputs = [x_slab, gm]
    in_specs = [pl.BlockSpec(x_slab.shape, lambda i: (0, 0)),
                pl.BlockSpec(gm.shape, lambda i: (0, 0))]
    flops = 0
    for bi, (w, b, gamma, beta) in enumerate(params):
        cin_blk = cin_pad if bi == 0 else Cout
        wband = build_banded_weights(w, W, cin_blk)              # (3, W*cin_blk, WCout) bf16
        g_lane = jnp.tile(gamma.reshape(1, Cout), (1, W)).astype(jnp.float32)
        be_lane = jnp.tile(beta.reshape(1, Cout), (1, W)).astype(jnp.float32)
        # conv bias b is NOT passed to the kernel (cancels exactly under batch-stat BN)
        flat_inputs += [wband, g_lane, be_lane]
        in_specs += [pl.BlockSpec(wband.shape, lambda i: (0, 0, 0)),
                     pl.BlockSpec(g_lane.shape, lambda i: (0, 0)),
                     pl.BlockSpec(be_lane.shape, lambda i: (0, 0))]
        flops += 3 * 2 * NH * (W * cin_blk) * WCout              # banded conv matmuls
        flops += 2 * 2 * WCout * WCout                           # merged BN-stat matmul
        flops += 12 * NH * WCout                                 # shifts / BN / LeakyReLU

    bytes_accessed = sum(int(np.prod(a.shape)) * a.dtype.itemsize for a in flat_inputs)
    bytes_accessed += NH * WCout * 4                             # f32 output
    # grid=(1,): everything is resident at once; be explicit about the VMEM budget.
    vmem_limit = int(min(64 * 1024 * 1024, max(16 * 1024 * 1024, 4 * bytes_accessed)))

    # TODO(synk): for realistic nnU-Net sizes, add an H-stripe grid axis (two-phase BN
    # stat reduction) so weight/activation DMA overlaps compute and v7x's second
    # TensorCore is used; at these toy shapes a single grid point is the right call.
    out_slab = pl.pallas_call(
        make_fused_kernel(num_convs, N, H, W, Cout),
        out_shape=jax.ShapeDtypeStruct((NH, WCout), jnp.float32),
        grid=(1,),
        in_specs=in_specs,
        out_specs=pl.BlockSpec((NH, WCout), lambda i: (0, 0)),
        compiler_params=pltpu.CompilerParams(
            dimension_semantics=("arbitrary",),
            vmem_limit_bytes=vmem_limit),
        cost_estimate=pl.CostEstimate(
            flops=int(flops),
            transcendentals=int(num_convs * WCout),
            bytes_accessed=int(bytes_accessed)),
    )(*flat_inputs)

    out = jnp.transpose(out_slab.reshape(N, H, W, Cout), (0, 3, 1, 2))  # back to NCHW
    kl_sum = jnp.float32(0.0)  # plain nn.Conv2d blocks -> kl stays 0
    return out, kl_sum


def init_stacked_conv_params(key, in_ch, out_ch, num_convs):
    """Deterministic parameter init (PyTorch-like uniform conv, perturbed BN affine)."""
    params = []
    for i in range(num_convs):
        cin = in_ch if i == 0 else out_ch
        key, k1, k2, k3, k4 = jax.random.split(key, 5)
        fan_in = cin * 3 * 3
        bound = 1.0 / (fan_in ** 0.5)
        w = jax.random.uniform(k1, (3, 3, cin, out_ch), jnp.float32, -bound, bound)
        b = jax.random.uniform(k2, (1, out_ch), jnp.float32, -bound, bound)
        gamma = 1.0 + 0.1 * jax.random.normal(k3, (1, out_ch), jnp.float32)
        beta = 0.1 * jax.random.normal(k4, (1, out_ch), jnp.float32)
        params.append((w, b, gamma, beta))
    return params


def reference_forward(x_nchw, params, matmul_dtype=jnp.float32):
    """Pure-JAX reference: conv(+bias) -> BN(batch stats, affine) -> LeakyReLU per block.

    With matmul_dtype=bf16 the conv operands are rounded exactly like the kernel's MXU
    operands (f32 accumulation), giving a tight numerical cross-check.
    """
    prec = (jax.lax.Precision.HIGHEST if matmul_dtype == jnp.float32
            else jax.lax.Precision.DEFAULT)
    x = x_nchw
    for (w, b, gamma, beta) in params:
        y = jax.lax.conv_general_dilated(
            x.astype(matmul_dtype), w.astype(matmul_dtype),
            window_strides=(1, 1), padding=((1, 1), (1, 1)),
            dimension_numbers=("NCHW", "HWIO", "NCHW"),
            preferred_element_type=jnp.float32, precision=prec)
        y = y + b.reshape(1, -1, 1, 1)
        mean = jnp.mean(y, axis=(0, 2, 3), keepdims=True)
        var = jnp.mean((y - mean) ** 2, axis=(0, 2, 3), keepdims=True)
        y = (y - mean) * jax.lax.rsqrt(var + BN_EPS)
        y = y * gamma.reshape(1, -1, 1, 1) + beta.reshape(1, -1, 1, 1)
        x = jnp.maximum(y, NEG_SLOPE * y)
    return x, jnp.float32(0.0)


if __name__ == "__main__":
    key = jax.random.PRNGKey(0)
    kx, kp = jax.random.split(key)

    # Small shapes consistent with the module: StackedConvLayers(4, 8, num_convs=2)
    N, Cin, H, W = 2, 4, 16, 16
    Cout, num_convs = 8, 2

    x = jax.random.normal(kx, (N, Cin, H, W), jnp.float32)
    params = init_stacked_conv_params(kp, Cin, Cout, num_convs)

    out, kl = jax.jit(stacked_conv_layers_forward)(x, params)
    jax.block_until_ready(out)
    jax.block_until_ready(kl)

    assert out.shape == (N, Cout, H, W), out.shape
    assert bool(jnp.isfinite(out).all())
    assert float(kl) == 0.0

    # Tight check vs a reference with matching bf16 MXU-operand rounding (kernel math).
    ref_bf16, _ = jax.jit(lambda a, p: reference_forward(a, p, jnp.bfloat16))(x, params)
    err_tight = float(jnp.max(jnp.abs(out - ref_bf16)))
    assert err_tight < 5e-3, f"max abs error vs bf16-operand reference: {err_tight}"

    # Loose check vs the full-f32 reference (bounds the bf16-operand deviation).
    ref_f32, _ = jax.jit(lambda a, p: reference_forward(a, p, jnp.float32))(x, params)
    err_loose = float(jnp.max(jnp.abs(out - ref_f32)))
    assert err_loose < 5e-2, f"max abs error vs f32 reference: {err_loose}"

    print("KERNEL_OK")
</pallas_src>

<mosaic_0001>
module attributes {stable_mosaic.version = 11 : i64} {
  func.func @kernel(%arg0: i32, %arg1: memref<32x128xbf16, #tpu.memory_space<vmem>>, %arg2: memref<128x128xf32, #tpu.memory_space<vmem>>, %arg3: memref<3x128x128xbf16, #tpu.memory_space<vmem>>, %arg4: memref<1x128xf32, #tpu.memory_space<vmem>>, %arg5: memref<1x128xf32, #tpu.memory_space<vmem>>, %arg6: memref<3x128x128xbf16, #tpu.memory_space<vmem>>, %arg7: memref<1x128xf32, #tpu.memory_space<vmem>>, %arg8: memref<1x128xf32, #tpu.memory_space<vmem>>, %arg9: memref<32x128xf32, #tpu.memory_space<vmem>>) attributes {dimension_semantics = [#tpu.dimension_semantics<arbitrary>], iteration_bounds = array<i64: 1>, scalar_prefetch = 0 : i64, scratch_operands = 0 : i64, tpu.core_type = #tpu.core_type<tc>, window_params = [{pipeline_mode = #tpu.pipeline_mode<synchronous>, transform_indices = @transform_0, window_bounds = array<i64: 32, 128>}, {pipeline_mode = #tpu.pipeline_mode<synchronous>, transform_indices = @transform_1, window_bounds = array<i64: 128, 128>}, {pipeline_mode = #tpu.pipeline_mode<synchronous>, transform_indices = @transform_2, window_bounds = array<i64: 3, 128, 128>}, {pipeline_mode = #tpu.pipeline_mode<synchronous>, transform_indices = @transform_3, window_bounds = array<i64: 1, 128>}, {pipeline_mode = #tpu.pipeline_mode<synchronous>, transform_indices = @transform_4, window_bounds = array<i64: 1, 128>}, {pipeline_mode = #tpu.pipeline_mode<synchronous>, transform_indices = @transform_5, window_bounds = array<i64: 3, 128, 128>}, {pipeline_mode = #tpu.pipeline_mode<synchronous>, transform_indices = @transform_6, window_bounds = array<i64: 1, 128>}, {pipeline_mode = #tpu.pipeline_mode<synchronous>, transform_indices = @transform_7, window_bounds = array<i64: 1, 128>}, {pipeline_mode = #tpu.pipeline_mode<synchronous>, transform_indices = @transform_8, window_bounds = array<i64: 32, 128>}]} {
    %0 = tpu.iota {dimensions = array<i32: 0>} : vector<32x128xi32>
    %c0_i32 = arith.constant 0 : i32
    %1 = vector.broadcast %c0_i32 : i32 to vector<32x128xi32>
    %2 = arith.cmpi ne, %0, %1 : vector<32x128xi32>
    %c15_i32 = arith.constant 15 : i32
    %3 = vector.broadcast %c15_i32 : i32 to vector<32x128xi32>
    %4 = arith.cmpi ne, %0, %3 : vector<32x128xi32>
    %c16_i32 = arith.constant 16 : i32
    %5 = vector.broadcast %c16_i32 : i32 to vector<32x128xi32>
    %6 = arith.cmpi ne, %0, %5 : vector<32x128xi32>
    %7 = arith.andi %2, %6 : vector<32x128xi1>
    %c31_i32 = arith.constant 31 : i32
    %8 = vector.broadcast %c31_i32 : i32 to vector<32x128xi32>
    %9 = arith.cmpi ne, %0, %8 : vector<32x128xi32>
    %10 = arith.andi %4, %9 : vector<32x128xi1>
    %cst = arith.constant 0.000000e+00 : f32
    %11 = vector.broadcast %cst : f32 to vector<1x128xf32>
    %c0 = arith.constant 0 : index
    %c0_0 = arith.constant 0 : index
    %12 = vector.load %arg2[%c0, %c0_0] : memref<128x128xf32, #tpu.memory_space<vmem>>, vector<128x128xf32>
    %c0_1 = arith.constant 0 : index
    %c0_2 = arith.constant 0 : index
    %13 = vector.load %arg1[%c0_1, %c0_2] : memref<32x128xbf16, #tpu.memory_space<vmem>>, vector<32x128xbf16>
    %c0_3 = arith.constant 0 : index
    %c0_4 = arith.constant 0 : index
    %c0_5 = arith.constant 0 : index
    %14 = vector.load %arg3[%c0_3, %c0_4, %c0_5] : memref<3x128x128xbf16, #tpu.memory_space<vmem>>, vector<1x128x128xbf16>
    %15 = vector.shape_cast %14 : vector<1x128x128xbf16> to vector<128x128xbf16>
    %cst_6 = arith.constant dense<0.000000e+00> : vector<32x128xf32>
    %16 = tpu.matmul %13, %15, %cst_6 {dimension_numbers = #tpu.dot_dimension_numbers<[1], [0], [0], [1], [0, 0, 1, 1], [], []>} : vector<32x128xbf16>, vector<128x128xbf16>, vector<32x128xf32> -> vector<32x128xf32>
    %c1 = arith.constant 1 : index
    %c0_7 = arith.constant 0 : index
    %c0_8 = arith.constant 0 : index
    %17 = vector.load %arg3[%c1, %c0_7, %c0_8] : memref<3x128x128xbf16, #tpu.memory_space<vmem>>, vector<1x128x128xbf16>
    %18 = vector.shape_cast %17 : vector<1x128x128xbf16> to vector<128x128xbf16>
    %cst_9 = arith.constant dense<0.000000e+00> : vector<32x128xf32>
    %19 = tpu.matmul %13, %18, %cst_9 {dimension_numbers = #tpu.dot_dimension_numbers<[1], [0], [0], [1], [0, 0, 1, 1], [], []>} : vector<32x128xbf16>, vector<128x128xbf16>, vector<32x128xf32> -> vector<32x128xf32>
    %c2 = arith.constant 2 : index
    %c0_10 = arith.constant 0 : index
    %c0_11 = arith.constant 0 : index
    %20 = vector.load %arg3[%c2, %c0_10, %c0_11] : memref<3x128x128xbf16, #tpu.memory_space<vmem>>, vector<1x128x128xbf16>
    %21 = vector.shape_cast %20 : vector<1x128x128xbf16> to vector<128x128xbf16>
    %cst_12 = arith.constant dense<0.000000e+00> : vector<32x128xf32>
    %22 = tpu.matmul %13, %21, %cst_12 {dimension_numbers = #tpu.dot_dimension_numbers<[1], [0], [0], [1], [0, 0, 1, 1], [], []>} : vector<32x128xbf16>, vector<128x128xbf16>, vector<32x128xf32> -> vector<32x128xf32>
    %23 = vector.extract_strided_slice %16 {offsets = [0, 0], sizes = [31, 128], strides = [1, 1]} : vector<32x128xf32> to vector<31x128xf32>
    %24 = tpu.concatenate %11, %23 in 0 : vector<1x128xf32>, vector<31x128xf32> -> vector<32x128xf32>
    %cst_13 = arith.constant 0.000000e+00 : f32
    %25 = vector.broadcast %cst_13 : f32 to vector<32x128xf32>
    %26 = arith.select %7, %24, %25 : vector<32x128xi1>, vector<32x128xf32>
    %27 = arith.addf %19, %26 : vector<32x128xf32>
    %28 = vector.extract_strided_slice %22 {offsets = [1, 0], sizes = [31, 128], strides = [1, 1]} : vector<32x128xf32> to vector<31x128xf32>
    %29 = tpu.concatenate %28, %11 in 0 : vector<31x128xf32>, vector<1x128xf32> -> vector<32x128xf32>
    %cst_14 = arith.constant 0.000000e+00 : f32
    %30 = vector.broadcast %cst_14 : f32 to vector<32x128xf32>
    %31 = arith.select %10, %29, %30 : vector<32x128xi1>, vector<32x128xf32>
    %32 = arith.addf %27, %31 : vector<32x128xf32>
    %cst_15 = arith.constant dense<0.000000e+00> : vector<128xf32>
    %33 = vector.multi_reduction <add>, %32, %cst_15 [0] : vector<32x128xf32> to vector<128xf32>
    %34 = vector.shape_cast %33 : vector<128xf32> to vector<1x128xf32>
    %35 = arith.mulf %32, %32 : vector<32x128xf32>
    %cst_16 = arith.constant dense<0.000000e+00> : vector<128xf32>
    %36 = vector.multi_reduction <add>, %35, %cst_16 [0] : vector<32x128xf32> to vector<128xf32>
    %37 = vector.shape_cast %36 : vector<128xf32> to vector<1x128xf32>
    %38 = tpu.concatenate %34, %37 in 0 : vector<1x128xf32>, vector<1x128xf32> -> vector<2x128xf32>
    %cst_17 = arith.constant dense<0.000000e+00> : vector<2x128xf32>
    %39 = tpu.matmul %38, %12, %cst_17 {dimension_numbers = #tpu.dot_dimension_numbers<[1], [0], [0], [1], [0, 0, 1, 1], [], []>} : vector<2x128xf32>, vector<128x128xf32>, vector<2x128xf32> -> vector<2x128xf32>
    %40 = vector.extract_strided_slice %39 {offsets = [0, 0], sizes = [1, 128], strides = [1, 1]} : vector<2x128xf32> to vector<1x128xf32>
    %41 = vector.extract_strided_slice %39 {offsets = [1, 0], sizes = [1, 128], strides = [1, 1]} : vector<2x128xf32> to vector<1x128xf32>
    %42 = arith.mulf %40, %40 : vector<1x128xf32>
    %43 = arith.subf %41, %42 : vector<1x128xf32>
    %cst_18 = arith.constant 0.000000e+00 : f32
    %44 = vector.broadcast %cst_18 : f32 to vector<1x128xf32>
    %45 = arith.maximumf %43, %44 : vector<1x128xf32>
    %cst_19 = arith.constant 9.99999974E-6 : f32
    %46 = vector.broadcast %cst_19 : f32 to vector<1x128xf32>
    %47 = arith.addf %45, %46 : vector<1x128xf32>
    %48 = math.rsqrt %47 : vector<1x128xf32>
    %c0_20 = arith.constant 0 : index
    %c0_21 = arith.constant 0 : index
    %49 = vector.load %arg4[%c0_20, %c0_21] : memref<1x128xf32, #tpu.memory_space<vmem>>, vector<1x128xf32>
    %50 = arith.mulf %48, %49 : vector<1x128xf32>
    %c0_22 = arith.constant 0 : index
    %c0_23 = arith.constant 0 : index
    %51 = vector.load %arg5[%c0_22, %c0_23] : memref<1x128xf32, #tpu.memory_space<vmem>>, vector<1x128xf32>
    %52 = arith.mulf %40, %50 : vector<1x128xf32>
    %53 = arith.subf %51, %52 : vector<1x128xf32>
    %54 = vector.broadcast %50 : vector<1x128xf32> to vector<32x128xf32>
    %55 = arith.mulf %32, %54 : vector<32x128xf32>
    %56 = vector.broadcast %53 : vector<1x128xf32> to vector<32x128xf32>
    %57 = arith.addf %55, %56 : vector<32x128xf32>
    %cst_24 = arith.constant 0.00999999977 : f32
    %58 = vector.broadcast %cst_24 : f32 to vector<32x128xf32>
    %59 = arith.mulf %58, %57 : vector<32x128xf32>
    %60 = arith.maximumf %57, %59 : vector<32x128xf32>
    %61 = arith.truncf %60 : vector<32x128xf32> to vector<32x128xbf16>
    %c0_25 = arith.constant 0 : index
    %c0_26 = arith.constant 0 : index
    %c0_27 = arith.constant 0 : index
    %62 = vector.load %arg6[%c0_25, %c0_26, %c0_27] : memref<3x128x128xbf16, #tpu.memory_space<vmem>>, vector<1x128x128xbf16>
    %63 = vector.shape_cast %62 : vector<1x128x128xbf16> to vector<128x128xbf16>
    %cst_28 = arith.constant dense<0.000000e+00> : vector<32x128xf32>
    %64 = tpu.matmul %61, %63, %cst_28 {dimension_numbers = #tpu.dot_dimension_numbers<[1], [0], [0], [1], [0, 0, 1, 1], [], []>} : vector<32x128xbf16>, vector<128x128xbf16>, vector<32x128xf32> -> vector<32x128xf32>
    %c1_29 = arith.constant 1 : index
    %c0_30 = arith.constant 0 : index
    %c0_31 = arith.constant 0 : index
    %65 = vector.load %arg6[%c1_29, %c0_30, %c0_31] : memref<3x128x128xbf16, #tpu.memory_space<vmem>>, vector<1x128x128xbf16>
    %66 = vector.shape_cast %65 : vector<1x128x128xbf16> to vector<128x128xbf16>
    %cst_32 = arith.constant dense<0.000000e+00> : vector<32x128xf32>
    %67 = tpu.matmul %61, %66, %cst_32 {dimension_numbers = #tpu.dot_dimension_numbers<[1], [0], [0], [1], [0, 0, 1, 1], [], []>} : vector<32x128xbf16>, vector<128x128xbf16>, vector<32x128xf32> -> vector<32x128xf32>
    %c2_33 = arith.constant 2 : index
    %c0_34 = arith.constant 0 : index
    %c0_35 = arith.constant 0 : index
    %68 = vector.load %arg6[%c2_33, %c0_34, %c0_35] : memref<3x128x128xbf16, #tpu.memory_space<vmem>>, vector<1x128x128xbf16>
    %69 = vector.shape_cast %68 : vector<1x128x128xbf16> to vector<128x128xbf16>
    %cst_36 = arith.constant dense<0.000000e+00> : vector<32x128xf32>
    %70 = tpu.matmul %61, %69, %cst_36 {dimension_numbers = #tpu.dot_dimension_numbers<[1], [0], [0], [1], [0, 0, 1, 1], [], []>} : vector<32x128xbf16>, vector<128x128xbf16>, vector<32x128xf32> -> vector<32x128xf32>
    %71 = vector.extract_strided_slice %64 {offsets = [0, 0], sizes = [31, 128], strides = [1, 1]} : vector<32x128xf32> to vector<31x128xf32>
    %72 = tpu.concatenate %11, %71 in 0 : vector<1x128xf32>, vector<31x128xf32> -> vector<32x128xf32>
    %cst_37 = arith.constant 0.000000e+00 : f32
    %73 = vector.broadcast %cst_37 : f32 to vector<32x128xf32>
    %74 = arith.select %7, %72, %73 : vector<32x128xi1>, vector<32x128xf32>
    %75 = arith.addf %67, %74 : vector<32x128xf32>
    %76 = vector.extract_strided_slice %70 {offsets = [1, 0], sizes = [31, 128], strides = [1, 1]} : vector<32x128xf32> to vector<31x128xf32>
    %77 = tpu.concatenate %76, %11 in 0 : vector<31x128xf32>, vector<1x128xf32> -> vector<32x128xf32>
    %cst_38 = arith.constant 0.000000e+00 : f32
    %78 = vector.broadcast %cst_38 : f32 to vector<32x128xf32>
    %79 = arith.select %10, %77, %78 : vector<32x128xi1>, vector<32x128xf32>
    %80 = arith.addf %75, %79 : vector<32x128xf32>
    %cst_39 = arith.constant dense<0.000000e+00> : vector<128xf32>
    %81 = vector.multi_reduction <add>, %80, %cst_39 [0] : vector<32x128xf32> to vector<128xf32>
    %82 = vector.shape_cast %81 : vector<128xf32> to vector<1x128xf32>
    %83 = arith.mulf %80, %80 : vector<32x128xf32>
    %cst_40 = arith.constant dense<0.000000e+00> : vector<128xf32>
    %84 = vector.multi_reduction <add>, %83, %cst_40 [0] : vector<32x128xf32> to vector<128xf32>
    %85 = vector.shape_cast %84 : vector<128xf32> to vector<1x128xf32>
    %86 = tpu.concatenate %82, %85 in 0 : vector<1x128xf32>, vector<1x128xf32> -> vector<2x128xf32>
    %cst_41 = arith.constant dense<0.000000e+00> : vector<2x128xf32>
    %87 = tpu.matmul %86, %12, %cst_41 {dimension_numbers = #tpu.dot_dimension_numbers<[1], [0], [0], [1], [0, 0, 1, 1], [], []>} : vector<2x128xf32>, vector<128x128xf32>, vector<2x128xf32> -> vector<2x128xf32>
    %88 = vector.extract_strided_slice %87 {offsets = [0, 0], sizes = [1, 128], strides = [1, 1]} : vector<2x128xf32> to vector<1x128xf32>
    %89 = vector.extract_strided_slice %87 {offsets = [1, 0], sizes = [1, 128], strides = [1, 1]} : vector<2x128xf32> to vector<1x128xf32>
    %90 = arith.mulf %88, %88 : vector<1x128xf32>
    %91 = arith.subf %89, %90 : vector<1x128xf32>
    %cst_42 = arith.constant 0.000000e+00 : f32
    %92 = vector.broadcast %cst_42 : f32 to vector<1x128xf32>
    %93 = arith.maximumf %91, %92 : vector<1x128xf32>
    %cst_43 = arith.constant 9.99999974E-6 : f32
    %94 = vector.broadcast %cst_43 : f32 to vector<1x128xf32>
    %95 = arith.addf %93, %94 : vector<1x128xf32>
    %96 = math.rsqrt %95 : vector<1x128xf32>
    %c0_44 = arith.constant 0 : index
    %c0_45 = arith.constant 0 : index
    %97 = vector.load %arg7[%c0_44, %c0_45] : memref<1x128xf32, #tpu.memory_space<vmem>>, vector<1x128xf32>
    %98 = arith.mulf %96, %97 : vector<1x128xf32>
    %c0_46 = arith.constant 0 : index
    %c0_47 = arith.constant 0 : index
    %99 = vector.load %arg8[%c0_46, %c0_47] : memref<1x128xf32, #tpu.memory_space<vmem>>, vector<1x128xf32>
    %100 = arith.mulf %88, %98 : vector<1x128xf32>
    %101 = arith.subf %99, %100 : vector<1x128xf32>
    %102 = vector.broadcast %98 : vector<1x128xf32> to vector<32x128xf32>
    %103 = arith.mulf %80, %102 : vector<32x128xf32>
    %104 = vector.broadcast %101 : vector<1x128xf32> to vector<32x128xf32>
    %105 = arith.addf %103, %104 : vector<32x128xf32>
    %cst_48 = arith.constant 0.00999999977 : f32
    %106 = vector.broadcast %cst_48 : f32 to vector<32x128xf32>
    %107 = arith.mulf %106, %105 : vector<32x128xf32>
    %108 = arith.maximumf %105, %107 : vector<32x128xf32>
    %c0_49 = arith.constant 0 : index
    %c0_50 = arith.constant 0 : index
    %109 = vector.load %arg9[%c0_49, %c0_50] : memref<32x128xf32, #tpu.memory_space<vmem>>, vector<32x128xf32>
    tpu.vector_store %arg9[%c0_49, %c0_50], %108 {strides = array<i32>} : memref<32x128xf32, #tpu.memory_space<vmem>>, vector<32x128xf32>,
    return
  }
  func.func @transform_0(%arg0: i32) -> (i32, i32) {
    %c0_i32 = arith.constant 0 : i32
    %c0_i32_0 = arith.constant 0 : i32
    %c0_i32_1 = arith.constant 0 : i32
    return %c0_i32, %c0_i32_0 : i32, i32
  }
  func.func @transform_1(%arg0: i32) -> (i32, i32) {
    %c0_i32 = arith.constant 0 : i32
    %c0_i32_0 = arith.constant 0 : i32
    %c0_i32_1 = arith.constant 0 : i32
    return %c0_i32, %c0_i32_0 : i32, i32
  }
  func.func @transform_2(%arg0: i32) -> (i32, i32, i32) {
    %c0_i32 = arith.constant 0 : i32
    %c0_i32_0 = arith.constant 0 : i32
    %c0_i32_1 = arith.constant 0 : i32
    %c0_i32_2 = arith.constant 0 : i32
    return %c0_i32, %c0_i32_0, %c0_i32_1 : i32, i32, i32
  }
  func.func @transform_3(%arg0: i32) -> (i32, i32) {
    %c0_i32 = arith.constant 0 : i32
    %c0_i32_0 = arith.constant 0 : i32
    %c0_i32_1 = arith.constant 0 : i32
    return %c0_i32, %c0_i32_0 : i32, i32
  }
  func.func @transform_4(%arg0: i32) -> (i32, i32) {
    %c0_i32 = arith.constant 0 : i32
    %c0_i32_0 = arith.constant 0 : i32
    %c0_i32_1 = arith.constant 0 : i32
    return %c0_i32, %c0_i32_0 : i32, i32
  }
  func.func @transform_5(%arg0: i32) -> (i32, i32, i32) {
    %c0_i32 = arith.constant 0 : i32
    %c0_i32_0 = arith.constant 0 : i32
    %c0_i32_1 = arith.constant 0 : i32
    %c0_i32_2 = arith.constant 0 : i32
    return %c0_i32, %c0_i32_0, %c0_i32_1 : i32, i32, i32
  }
  func.func @transform_6(%arg0: i32) -> (i32, i32) {
    %c0_i32 = arith.constant 0 : i32
    %c0_i32_0 = arith.constant 0 : i32
    %c0_i32_1 = arith.constant 0 : i32
    return %c0_i32, %c0_i32_0 : i32, i32
  }
  func.func @transform_7(%arg0: i32) -> (i32, i32) {
    %c0_i32 = arith.constant 0 : i32
    %c0_i32_0 = arith.constant 0 : i32
    %c0_i32_1 = arith.constant 0 : i32
    return %c0_i32, %c0_i32_0 : i32, i32
  }
  func.func @transform_8(%arg0: i32) -> (i32, i32) {
    %c0_i32 = arith.constant 0 : i32
    %c0_i32_0 = arith.constant 0 : i32
    %c0_i32_1 = arith.constant 0 : i32
    return %c0_i32, %c0_i32_0 : i32, i32
  }
}

</mosaic_0001>

<llo_original>
// kernel: stacked_conv_layers_forward.1
$region0: #{stacked_conv_layers_forward.1}
  #allocation0 [shape = 'u32[]', space=smem, size = 0x4, offset = 0x4, fixed_abs, tag = 'smem constant byte address 0x4 - core index']
  #allocation1 [shape = 'u32[144,128]{1,0:T(1,128)}', space=vmem, size = 0x12000, scoped, tag = 'internal scratch']
  %s0 = inlined_call_operand.vmem [shape: bf16[32,128], index: 0, kind: input, shape index: {}]
  %s1 = inlined_call_operand.vmem [shape: f32[128,128], index: 1, kind: input, shape index: {}]
  %s2 = inlined_call_operand.vmem [shape: bf16[3,128,128], index: 2, kind: input, shape index: {}]
  %s3 = inlined_call_operand.vmem [shape: f32[1,128], index: 3, kind: input, shape index: {}]
  %s4 = inlined_call_operand.vmem [shape: f32[1,128], index: 4, kind: input, shape index: {}]
  %s5 = inlined_call_operand.vmem [shape: bf16[3,128,128], index: 5, kind: input, shape index: {}]
  %s6 = inlined_call_operand.vmem [shape: f32[1,128], index: 6, kind: input, shape index: {}]
  %s7 = inlined_call_operand.vmem [shape: f32[1,128], index: 7, kind: input, shape index: {}]
  %s8 = inlined_call_operand.vmem [shape: f32[32,128], index: 8, kind: output, shape index: {}]
  %s9 = sld [smem:[#allocation0]]
  $region42: #{stacked_conv_layers_forward.1} parent=0
    _
  %s11 = ssub.s32 1, %s9
  %s12 = scalar_select 0, %s11, %s9
  // Predicated region
  $region2: #{stacked_conv_layers_forward.1} parent=0 // pred_check
    _
  $region3: #{stacked_conv_layers_forward.1} parent=0 // pred_check_branch
    %14 = sbr.rel (0) target = $region5
  $region4: #{stacked_conv_layers_forward.1} parent=0 // pred_region
    _
  $region5: #{stacked_conv_layers_forward.1} parent=0 // pred_fallthru
    _
  // Predicated region
  $region6: #{stacked_conv_layers_forward.1} parent=0 // pred_check
    _
  $region7: #{stacked_conv_layers_forward.1} parent=0 // pred_check_branch
    %16 = sbr.rel (0) target = $region9
  $region8: #{stacked_conv_layers_forward.1} parent=0 // pred_region
    _
  $region9: #{stacked_conv_layers_forward.1} parent=0 // pred_fallthru
    _
  // Predicated region
  $region10: #{stacked_conv_layers_forward.1} parent=0 // pred_check
    _
  $region11: #{stacked_conv_layers_forward.1} parent=0 // pred_check_branch
    %18 = sbr.rel (0) target = $region13
  $region12: #{stacked_conv_layers_forward.1} parent=0 // pred_region
    _
  $region13: #{stacked_conv_layers_forward.1} parent=0 // pred_fallthru
    _
  // Predicated region
  $region14: #{stacked_conv_layers_forward.1} parent=0 // pred_check
    _
  $region15: #{stacked_conv_layers_forward.1} parent=0 // pred_check_branch
    %20 = sbr.rel (0) target = $region17
  $region16: #{stacked_conv_layers_forward.1} parent=0 // pred_region
    _
  $region17: #{stacked_conv_layers_forward.1} parent=0 // pred_fallthru
    _
  // Predicated region
  $region18: #{stacked_conv_layers_forward.1} parent=0 // pred_check
    _
  $region19: #{stacked_conv_layers_forward.1} parent=0 // pred_check_branch
    %22 = sbr.rel (0) target = $region21
  $region20: #{stacked_conv_layers_forward.1} parent=0 // pred_region
    _
  $region21: #{stacked_conv_layers_forward.1} parent=0 // pred_fallthru
    _
  // Predicated region
  $region22: #{stacked_conv_layers_forward.1} parent=0 // pred_check
    _
  $region23: #{stacked_conv_layers_forward.1} parent=0 // pred_check_branch
    %24 = sbr.rel (0) target = $region25
  $region24: #{stacked_conv_layers_forward.1} parent=0 // pred_region
    _
  $region25: #{stacked_conv_layers_forward.1} parent=0 // pred_fallthru
    _
  // Predicated region
  $region26: #{stacked_conv_layers_forward.1} parent=0 // pred_check
    _
  $region27: #{stacked_conv_layers_forward.1} parent=0 // pred_check_branch
    %26 = sbr.rel (0) target = $region29
  $region28: #{stacked_conv_layers_forward.1} parent=0 // pred_region
    _
  $region29: #{stacked_conv_layers_forward.1} parent=0 // pred_fallthru
    _
  // Predicated region
  $region30: #{stacked_conv_layers_forward.1} parent=0 // pred_check
    _
  $region31: #{stacked_conv_layers_forward.1} parent=0 // pred_check_branch
    %28 = sbr.rel (0) target = $region33
  $region32: #{stacked_conv_layers_forward.1} parent=0 // pred_region
    _
  $region33: #{stacked_conv_layers_forward.1} parent=0 // pred_fallthru
    _
  %v30 = vlaneseq
  %v31 = vshrl.u32 %v30, 7
  %v32 = vadd.s32 %v31, 8
  %v33 = vadd.s32 %v31, 16
  %v34 = vadd.s32 %v31, 24
  %vm35 = vcmp.ne.s32.totalorder %v31, 0
  %vm36 = vcmp.ne.s32.totalorder %v32, 0
  %vm37 = vcmp.ne.s32.totalorder %v33, 0
  %vm38 = vcmp.ne.s32.totalorder %v34, 0
  %vm39 = vcmp.ne.s32.totalorder %v31, 15
  %vm40 = vcmp.ne.s32.totalorder %v32, 15
  %vm41 = vcmp.ne.s32.totalorder %v33, 15
  %vm42 = vcmp.ne.s32.totalorder %v34, 15
  %vm43 = vcmp.ne.s32.totalorder %v31, 16
  %vm44 = vcmp.ne.s32.totalorder %v32, 16
  %vm45 = vcmp.ne.s32.totalorder %v33, 16
  %vm46 = vcmp.ne.s32.totalorder %v34, 16
  %vm47 = vmand %vm35, %vm43
  %vm48 = vmand %vm36, %vm44
  %vm49 = vmand %vm37, %vm45
  %vm50 = vmand %vm38, %vm46
  %vm51 = vcmp.ne.s32.totalorder %v31, 31
  %vm52 = vcmp.ne.s32.totalorder %v32, 31
  %vm53 = vcmp.ne.s32.totalorder %v33, 31
  %vm54 = vcmp.ne.s32.totalorder %v34, 31
  %vm55 = vmand %vm39, %vm51
  %vm56 = vmand %vm40, %vm52
  %vm57 = vmand %vm41, %vm53
  %vm58 = vmand %vm42, %vm54
  %v59 = vld [vmem:[%s1] sm:$0xff]
  %v60 = vld [vmem:[%s1 + $0x8] sm:$0xff]
  %v61 = vld [vmem:[%s1 + $0x10] sm:$0xff]
  %v62 = vld [vmem:[%s1 + $0x18] sm:$0xff]
  %v63 = vld [vmem:[%s1 + $0x20] sm:$0xff]
  %v64 = vld [vmem:[%s1 + $0x28] sm:$0xff]
  %v65 = vld [vmem:[%s1 + $0x30] sm:$0xff]
  %v66 = vld [vmem:[%s1 + $0x38] sm:$0xff]
  %v67 = vld [vmem:[%s1 + $0x40] sm:$0xff]
  %v68 = vld [vmem:[%s1 + $0x48] sm:$0xff]
  %v69 = vld [vmem:[%s1 + $0x50] sm:$0xff]
  %v70 = vld [vmem:[%s1 + $0x58] sm:$0xff]
  %v71 = vld [vmem:[%s1 + $0x60] sm:$0xff]
  %v72 = vld [vmem:[%s1 + $0x68] sm:$0xff]
  %v73 = vld [vmem:[%s1 + $0x70] sm:$0xff]
  %v74 = vld [vmem:[%s1 + $0x78] sm:$0xff]
  %v75 = vld [vmem:[%s0] sm:$0xf]
  %v76 = vld [vmem:[%s0 + $0x4] sm:$0xf]
  %v77 = vld [vmem:[%s0 + $0x8] sm:$0xf]
  %v78 = vld [vmem:[%s0 + $0xc] sm:$0xf]
  %v79 = vld [vmem:[%s2] sm:$0xf]
  %v80 = vld [vmem:[%s2 + $0x4] sm:$0xf]
  %v81 = vld [vmem:[%s2 + $0x8] sm:$0xf]
  %v82 = vld [vmem:[%s2 + $0xc] sm:$0xf]
  %v83 = vld [vmem:[%s2 + $0x10] sm:$0xf]
  %v84 = vld [vmem:[%s2 + $0x14] sm:$0xf]
  %v85 = vld [vmem:[%s2 + $0x18] sm:$0xf]
  %v86 = vld [vmem:[%s2 + $0x1c] sm:$0xf]
  %v87 = vld [vmem:[%s2 + $0x20] sm:$0xf]
  %v88 = vld [vmem:[%s2 + $0x24] sm:$0xf]
  %v89 = vld [vmem:[%s2 + $0x28] sm:$0xf]
  %v90 = vld [vmem:[%s2 + $0x2c] sm:$0xf]
  %v91 = vld [vmem:[%s2 + $0x30] sm:$0xf]
  %v92 = vld [vmem:[%s2 + $0x34] sm:$0xf]
  %v93 = vld [vmem:[%s2 + $0x38] sm:$0xf]
  %v94 = vld [vmem:[%s2 + $0x3c] sm:$0xf]
  %v99 = vunpack.c.l.b16 %v75
  %v100 = vunpack.c.l.b16 %v76
  %v101 = vunpack.c.l.b16 %v77
  %v102 = vunpack.c.l.b16 %v78
  %v103 = vpack.c.b16 %v100, %v99
  %v104 = vpack.c.b16 %v102, %v101
  %v123 = vunpack.c.l.b16 %v79
  %v124 = vunpack.c.l.b16 %v80
  %v125 = vunpack.c.l.b16 %v81
  %v126 = vunpack.c.l.b16 %v82
  %v127 = vunpack.c.l.b16 %v83
  %v128 = vunpack.c.l.b16 %v84
  %v129 = vunpack.c.l.b16 %v85
  %v130 = vunpack.c.l.b16 %v86
  %v131 = vunpack.c.l.b16 %v87
  %v132 = vunpack.c.l.b16 %v88
  %v133 = vunpack.c.l.b16 %v89
  %v134 = vunpack.c.l.b16 %v90
  %v135 = vunpack.c.l.b16 %v91
  %v136 = vunpack.c.l.b16 %v92
  %v137 = vunpack.c.l.b16 %v93
  %v138 = vunpack.c.l.b16 %v94
  %v139 = vpack.c.b16 %v124, %v123
  %v140 = vpack.c.b16 %v126, %v125
  %v141 = vpack.c.b16 %v128, %v127
  %v142 = vpack.c.b16 %v130, %v129
  %v143 = vpack.c.b16 %v132, %v131
  %v144 = vpack.c.b16 %v134, %v133
  %v145 = vpack.c.b16 %v136, %v135
  %v146 = vpack.c.b16 %v138, %v137
  %155 = vmatprep.subr.bf16.mxu0 0
  %156 = vmatpush1.bf16.msra.mxu0 %v139
  %157 = vmatprep.subr.bf16.mxu0 0
  %158 = vmatpush1.bf16.msra.mxu0 %v140
  %159 = vmatprep.subr.bf16.mxu0 0
  %160 = vmatpush1.bf16.msra.mxu0 %v141
  %161 = vmatprep.subr.bf16.mxu0 0
  %162 = vmatpush1.bf16.msra.mxu0 %v142
  %163 = vmatprep.subr.bf16.mxu0 0
  %164 = vmatpush1.bf16.msra.mxu0 %v143
  %165 = vmatprep.subr.bf16.mxu0 0
  %166 = vmatpush1.bf16.msra.mxu0 %v144
  %167 = vmatprep.subr.bf16.mxu0 0
  %168 = vmatpush1.bf16.msra.mxu0 %v145
  %169 = vmatprep.subr.bf16.mxu0 0
  %170 = vmatpush1.bf16.msra.mxu0 %v146
  %171 = vmatprep.subr.bf16.mxu0 0
  %172 = vmatpush1.bf16.msra.mxu0 0
  %173 = vmatprep.subr.bf16.mxu0 0
  %174 = vmatpush1.bf16.msra.mxu0 0
  %175 = vmatprep.subr.bf16.mxu0 0
  %176 = vmatpush1.bf16.msra.mxu0 0
  %177 = vmatprep.subr.bf16.mxu0 0
  %178 = vmatpush1.bf16.msra.mxu0 0
  %179 = vmatprep.subr.bf16.mxu0 0
  %180 = vmatpush1.bf16.msra.mxu0 0
  %181 = vmatprep.subr.bf16.mxu0 0
  %182 = vmatpush1.bf16.msra.mxu0 0
  %183 = vmatprep.subr.bf16.mxu0 0
  %184 = vmatpush1.bf16.msra.mxu0 0
  %185 = vmatprep.subr.bf16.mxu0 0
  %186 = vmatpush1.bf16.msra.mxu0 0
  %187 = vmatprep.mubr.bf16.mxu0 0
  %188 = vmatmul.mubr.bf16.gmra.mrb[0].mxu0 %v103
  %v189 = vpop.f32.mrb[0].mxu0
  %v190 = vadd.f32 0.0, %v189
  %v191 = vpop.f32.mrb[0].mxu0
  %v192 = vpop.f32.mrb[0].mxu0
  %v193 = vadd.f32 0.0, %v192
  %v194 = vpop.f32.mrb[0].mxu0
  %195 = vmatprep.mubr.bf16.mxu0 0
  %196 = vmatmul.mubr.bf16.gmra.mrb[0].mxu0 %v104
  %v197 = vpop.f32.mrb[0].mxu0
  %v198 = vadd.f32 0.0, %v197
  %v199 = vpop.f32.mrb[0].mxu0
  %v200 = vpop.f32.mrb[0].mxu0
  %v201 = vadd.f32 0.0, %v200
  %v202 = vpop.f32.mrb[0].mxu0
  %203 = vdwg.mxu0
  %s204 = scalar_lea.vmem %s2, 64
  %v205 = vld [vmem:[%s204] sm:$0xf]
  %v206 = vld [vmem:[%s204 + $0x4] sm:$0xf]
  %v207 = vld [vmem:[%s204 + $0x8] sm:$0xf]
  %v208 = vld [vmem:[%s204 + $0xc] sm:$0xf]
  %v209 = vld [vmem:[%s204 + $0x10] sm:$0xf]
  %v210 = vld [vmem:[%s204 + $0x14] sm:$0xf]
  %v211 = vld [vmem:[%s204 + $0x18] sm:$0xf]
  %v212 = vld [vmem:[%s204 + $0x1c] sm:$0xf]
  %v213 = vld [vmem:[%s204 + $0x20] sm:$0xf]
  %v214 = vld [vmem:[%s204 + $0x24] sm:$0xf]
  %v215 = vld [vmem:[%s204 + $0x28] sm:$0xf]
  %v216 = vld [vmem:[%s204 + $0x2c] sm:$0xf]
  %v217 = vld [vmem:[%s204 + $0x30] sm:$0xf]
  %v218 = vld [vmem:[%s204 + $0x34] sm:$0xf]
  %v219 = vld [vmem:[%s204 + $0x38] sm:$0xf]
  %v220 = vld [vmem:[%s204 + $0x3c] sm:$0xf]
  %s221 = scalar_lea.vmem %s2, 128
  %v222 = vld [vmem:[%s221] sm:$0xf]
  %v223 = vld [vmem:[%s221 + $0x4] sm:$0xf]
  %v224 = vld [vmem:[%s221 + $0x8] sm:$0xf]
  %v225 = vld [vmem:[%s221 + $0xc] sm:$0xf]
  %v226 = vld [vmem:[%s221 + $0x10] sm:$0xf]
  %v227 = vld [vmem:[%s221 + $0x14] sm:$0xf]
  %v228 = vld [vmem:[%s221 + $0x18] sm:$0xf]
  %v229 = vld [vmem:[%s221 + $0x1c] sm:$0xf]
  %v230 = vld [vmem:[%s221 + $0x20] sm:$0xf]
  %v231 = vld [vmem:[%s221 + $0x24] sm:$0xf]
  %v232 = vld [vmem:[%s221 + $0x28] sm:$0xf]
  %v233 = vld [vmem:[%s221 + $0x2c] sm:$0xf]
  %v234 = vld [vmem:[%s221 + $0x30] sm:$0xf]
  %v235 = vld [vmem:[%s221 + $0x34] sm:$0xf]
  %v236 = vld [vmem:[%s221 + $0x38] sm:$0xf]
  %v237 = vld [vmem:[%s221 + $0x3c] sm:$0xf]
  %v254 = vunpack.c.l.b16 %v222
  %v255 = vunpack.c.l.b16 %v223
  %v256 = vunpack.c.l.b16 %v224
  %v257 = vunpack.c.l.b16 %v225
  %v258 = vunpack.c.l.b16 %v226
  %v259 = vunpack.c.l.b16 %v227
  %v260 = vunpack.c.l.b16 %v228
  %v261 = vunpack.c.l.b16 %v229
  %v262 = vunpack.c.l.b16 %v230
  %v263 = vunpack.c.l.b16 %v231
  %v264 = vunpack.c.l.b16 %v232
  %v265 = vunpack.c.l.b16 %v233
  %v266 = vunpack.c.l.b16 %v234
  %v267 = vunpack.c.l.b16 %v235
  %v268 = vunpack.c.l.b16 %v236
  %v269 = vunpack.c.l.b16 %v237
  %v270 = vpack.c.b16 %v255, %v254
  %v271 = vpack.c.b16 %v257, %v256
  %v272 = vpack.c.b16 %v259, %v258
  %v273 = vpack.c.b16 %v261, %v260
  %v274 = vpack.c.b16 %v263, %v262
  %v275 = vpack.c.b16 %v265, %v264
  %v276 = vpack.c.b16 %v267, %v266
  %v277 = vpack.c.b16 %v269, %v268
  %286 = vmatprep.subr.bf16.mxu0 0
  %287 = vmatpush1.bf16.msra.mxu0 %v270
  %288 = vmatprep.subr.bf16.mxu0 0
  %289 = vmatpush1.bf16.msra.mxu0 %v271
  %290 = vmatprep.subr.bf16.mxu0 0
  %291 = vmatpush1.bf16.msra.mxu0 %v272
  %292 = vmatprep.subr.bf16.mxu0 0
  %293 = vmatpush1.bf16.msra.mxu0 %v273
  %294 = vmatprep.subr.bf16.mxu0 0
  %295 = vmatpush1.bf16.msra.mxu0 %v274
  %296 = vmatprep.subr.bf16.mxu0 0
  %297 = vmatpush1.bf16.msra.mxu0 %v275
  %298 = vmatprep.subr.bf16.mxu0 0
  %299 = vmatpush1.bf16.msra.mxu0 %v276
  %300 = vmatprep.subr.bf16.mxu0 0
  %301 = vmatpush1.bf16.msra.mxu0 %v277
  %302 = vmatprep.subr.bf16.mxu0 0
  %303 = vmatpush1.bf16.msra.mxu0 0
  %304 = vmatprep.subr.bf16.mxu0 0
  %305 = vmatpush1.bf16.msra.mxu0 0
  %306 = vmatprep.subr.bf16.mxu0 0
  %307 = vmatpush1.bf16.msra.mxu0 0
  %308 = vmatprep.subr.bf16.mxu0 0
  %309 = vmatpush1.bf16.msra.mxu0 0
  %310 = vmatprep.subr.bf16.mxu0 0
  %311 = vmatpush1.bf16.msra.mxu0 0
  %312 = vmatprep.subr.bf16.mxu0 0
  %313 = vmatpush1.bf16.msra.mxu0 0
  %314 = vmatprep.subr.bf16.mxu0 0
  %315 = vmatpush1.bf16.msra.mxu0 0
  %316 = vmatprep.subr.bf16.mxu0 0
  %317 = vmatpush1.bf16.msra.mxu0 0
  %318 = vmatprep.mubr.bf16.mxu0 0
  %319 = vmatmul.mubr.bf16.gmra.mrb[0].mxu0 %v103
  %v320 = vpop.f32.mrb[0].mxu0
  %v321 = vadd.f32 0.0, %v320
  %v322 = vpop.f32.mrb[0].mxu0
  %v323 = vpop.f32.mrb[0].mxu0
  %v324 = vadd.f32 0.0, %v323
  %v325 = vpop.f32.mrb[0].mxu0
  %326 = vmatprep.mubr.bf16.mxu0 0
  %327 = vmatmul.mubr.bf16.gmra.mrb[0].mxu0 %v104
  %v328 = vpop.f32.mrb[0].mxu0
  %v329 = vadd.f32 0.0, %v328
  %v330 = vpop.f32.mrb[0].mxu0
  %v331 = vpop.f32.mrb[0].mxu0
  %v332 = vadd.f32 0.0, %v331
  %v333 = vpop.f32.mrb[0].mxu0
  %334 = vdwg.mxu0
  %vm339 = vcmask 1040384
  %v340 = vrot.slane %v190, 7
  %v341 = vrot.slane %v193, 7
  %v342 = vsel %vm339, %v340, %v341
  %v343 = vrot.slane %v198, 7
  %v344 = vsel %vm339, %v341, %v343
  %v345 = vrot.slane %v201, 7
  %v346 = vsel %vm339, %v343, %v345
  %v351 = vsel %vm339, 0.0, %v340
  %v352 = vsel %vm47, %v351, 0.0
  %v353 = vsel %vm48, %v342, 0.0
  %v354 = vsel %vm49, %v344, 0.0
  %v355 = vsel %vm50, %v346, 0.0
  %v372 = vunpack.c.l.b16 %v205
  %v373 = vunpack.c.l.b16 %v206
  %v374 = vunpack.c.l.b16 %v207
  %v375 = vunpack.c.l.b16 %v208
  %v376 = vunpack.c.l.b16 %v209
  %v377 = vunpack.c.l.b16 %v210
  %v378 = vunpack.c.l.b16 %v211
  %v379 = vunpack.c.l.b16 %v212
  %v380 = vunpack.c.l.b16 %v213
  %v381 = vunpack.c.l.b16 %v214
  %v382 = vunpack.c.l.b16 %v215
  %v383 = vunpack.c.l.b16 %v216
  %v384 = vunpack.c.l.b16 %v217
  %v385 = vunpack.c.l.b16 %v218
  %v386 = vunpack.c.l.b16 %v219
  %v387 = vunpack.c.l.b16 %v220
  %v388 = vpack.c.b16 %v373, %v372
  %v389 = vpack.c.b16 %v375, %v374
  %v390 = vpack.c.b16 %v377, %v376
  %v391 = vpack.c.b16 %v379, %v378
  %v392 = vpack.c.b16 %v381, %v380
  %v393 = vpack.c.b16 %v383, %v382
  %v394 = vpack.c.b16 %v385, %v384
  %v395 = vpack.c.b16 %v387, %v386
  %404 = vmatprep.subr.bf16.mxu0 0
  %405 = vmatpush1.bf16.msra.mxu0 %v388
  %406 = vmatprep.subr.bf16.mxu0 0
  %407 = vmatpush1.bf16.msra.mxu0 %v389
  %408 = vmatprep.subr.bf16.mxu0 0
  %409 = vmatpush1.bf16.msra.mxu0 %v390
  %410 = vmatprep.subr.bf16.mxu0 0
  %411 = vmatpush1.bf16.msra.mxu0 %v391
  %412 = vmatprep.subr.bf16.mxu0 0
  %413 = vmatpush1.bf16.msra.mxu0 %v392
  %414 = vmatprep.subr.bf16.mxu0 0
  %415 = vmatpush1.bf16.msra.mxu0 %v393
  %416 = vmatprep.subr.bf16.mxu0 0
  %417 = vmatpush1.bf16.msra.mxu0 %v394
  %418 = vmatprep.subr.bf16.mxu0 0
  %419 = vmatpush1.bf16.msra.mxu0 %v395
  %420 = vmatprep.subr.bf16.mxu0 0
  %421 = vmatpush1.bf16.msra.mxu0 0
  %422 = vmatprep.subr.bf16.mxu0 0
  %423 = vmatpush1.bf16.msra.mxu0 0
  %424 = vmatprep.subr.bf16.mxu0 0
  %425 = vmatpush1.bf16.msra.mxu0 0
  %426 = vmatprep.subr.bf16.mxu0 0
  %427 = vmatpush1.bf16.msra.mxu0 0
  %428 = vmatprep.subr.bf16.mxu0 0
  %429 = vmatpush1.bf16.msra.mxu0 0
  %430 = vmatprep.subr.bf16.mxu0 0
  %431 = vmatpush1.bf16.msra.mxu0 0
  %432 = vmatprep.subr.bf16.mxu0 0
  %433 = vmatpush1.bf16.msra.mxu0 0
  %434 = vmatprep.subr.bf16.mxu0 0
  %435 = vmatpush1.bf16.msra.mxu0 0
  %436 = vmatprep.mubr.bf16.mxu0 0
  %437 = vmatmul.mubr.bf16.gmra.mrb[0].mxu0 %v103
  %v438 = vpop.f32.mrb[0].mxu0
  %v439 = vadd.f32 %v352, %v438
  %v440 = vpop.f32.mrb[0].mxu0
  %v441 = vpop.f32.mrb[0].mxu0
  %v442 = vadd.f32 %v353, %v441
  %v443 = vpop.f32.mrb[0].mxu0
  %444 = vmatprep.mubr.bf16.mxu0 0
  %445 = vmatmul.mubr.bf16.gmra.mrb[0].mxu0 %v104
  %v446 = vpop.f32.mrb[0].mxu0
  %v447 = vadd.f32 %v354, %v446
  %v448 = vpop.f32.mrb[0].mxu0
  %v449 = vpop.f32.mrb[0].mxu0
  %v450 = vadd.f32 %v355, %v449
  %v451 = vpop.f32.mrb[0].mxu0
  %452 = vdwg.mxu0
  %vm457 = vcmask 1046528
  %v458 = vrot.slane %v321, 1
  %v459 = vrot.slane %v324, 1
  %v460 = vsel %vm457, %v458, %v459
  %v461 = vrot.slane %v329, 1
  %v462 = vsel %vm457, %v459, %v461
  %v463 = vrot.slane %v332, 1
  %v464 = vsel %vm457, %v461, %v463
  %v469 = vsel %vm457, %v463, 0.0
  %v470 = vsel %vm55, %v460, 0.0
  %v471 = vsel %vm56, %v462, 0.0
  %v472 = vsel %vm57, %v464, 0.0
  %v473 = vsel %vm58, %v469, 0.0
  %v474 = vadd.f32 %v439, %v470
  %v475 = vadd.f32 %v442, %v471
  %v476 = vadd.f32 %v447, %v472
  %v477 = vadd.f32 %v450, %v473
  %v478 = vadd.f32 %v474, %v475
  %v479 = vadd.f32 %v478, %v476
  %v480 = vadd.f32 %v479, %v477
  %v481 = vrot.slane %v480, 4
  %v482 = vadd.f32 %v480, %v481
  %v483 = vrot.slane %v482, 2
  %v484 = vadd.f32 %v482, %v483
  %v485 = vrot.slane %v484, 1
  %v486 = vadd.f32 %v484, %v485
  %v487 = vmul.f32 %v474, %v474
  %v488 = vmul.f32 %v475, %v475
  %v489 = vmul.f32 %v476, %v476
  %v490 = vmul.f32 %v477, %v477
  %v491 = vadd.f32 %v487, %v488
  %v492 = vadd.f32 %v491, %v489
  %v493 = vadd.f32 %v492, %v490
  %v494 = vrot.slane %v493, 4
  %v495 = vadd.f32 %v493, %v494
  %v496 = vrot.slane %v495, 2
  %v497 = vadd.f32 %v495, %v496
  %v498 = vrot.slane %v497, 1
  %v499 = vadd.f32 %v497, %v498
  %v500 = vsel %vm339, %v486, %v499
  %501 = vmatprep.subr.mxu0 0.0
  %502 = vmatpush1.msra.mxu0 %v59
  %503 = vmatprep.subr.mxu0 0.0
  %504 = vmatpush1.msra.mxu0 %v60
  %505 = vmatprep.subr.mxu0 0.0
  %506 = vmatpush1.msra.mxu0 %v61
  %507 = vmatprep.subr.mxu0 0.0
  %508 = vmatpush1.msra.mxu0 %v62
  %509 = vmatprep.subr.mxu0 0.0
  %510 = vmatpush1.msra.mxu0 %v63
  %511 = vmatprep.subr.mxu0 0.0
  %512 = vmatpush1.msra.mxu0 %v64
  %513 = vmatprep.subr.mxu0 0.0
  %514 = vmatpush1.msra.mxu0 %v65
  %515 = vmatprep.subr.mxu0 0.0
  %516 = vmatpush1.msra.mxu0 %v66
  %517 = vmatprep.subr.mxu0 0.0
  %518 = vmatpush1.msra.mxu0 %v67
  %519 = vmatprep.subr.mxu0 0.0
  %520 = vmatpush1.msra.mxu0 %v68
  %521 = vmatprep.subr.mxu0 0.0
  %522 = vmatpush1.msra.mxu0 %v69
  %523 = vmatprep.subr.mxu0 0.0
  %524 = vmatpush1.msra.mxu0 %v70
  %525 = vmatprep.subr.mxu0 0.0
  %526 = vmatpush1.msra.mxu0 %v71
  %527 = vmatprep.subr.mxu0 0.0
  %528 = vmatpush1.msra.mxu0 %v72
  %529 = vmatprep.subr.mxu0 0.0
  %530 = vmatpush1.msra.mxu0 %v73
  %531 = vmatprep.subr.mxu0 0.0
  %532 = vmatpush1.msra.mxu0 %v74
  %533 = vmatprep.subr.mxu0 0.0
  %534 = vmatpush1.msra.mxu0 0.0
  %535 = vmatprep.subr.mxu0 0.0
  %536 = vmatpush1.msra.mxu0 0.0
  %537 = vmatprep.subr.mxu0 0.0
  %538 = vmatpush1.msra.mxu0 0.0
  %539 = vmatprep.subr.mxu0 0.0
  %540 = vmatpush1.msra.mxu0 0.0
  %541 = vmatprep.subr.mxu0 0.0
  %542 = vmatpush1.msra.mxu0 0.0
  %543 = vmatprep.subr.mxu0 0.0
  %544 = vmatpush1.msra.mxu0 0.0
  %545 = vmatprep.subr.mxu0 0.0
  %546 = vmatpush1.msra.mxu0 0.0
  %547 = vmatprep.subr.mxu0 0.0
  %548 = vmatpush1.msra.mxu0 0.0
  %549 = vmatprep.subr.mxu0 0.0
  %550 = vmatpush1.msra.mxu0 0.0
  %551 = vmatprep.subr.mxu0 0.0
  %552 = vmatpush1.msra.mxu0 0.0
  %553 = vmatprep.subr.mxu0 0.0
  %554 = vmatpush1.msra.mxu0 0.0
  %555 = vmatprep.subr.mxu0 0.0
  %556 = vmatpush1.msra.mxu0 0.0
  %557 = vmatprep.subr.mxu0 0.0
  %558 = vmatpush1.msra.mxu0 0.0
  %559 = vmatprep.subr.mxu0 0.0
  %560 = vmatpush1.msra.mxu0 0.0
  %561 = vmatprep.subr.mxu0 0.0
  %562 = vmatpush1.msra.mxu0 0.0
  %563 = vmatprep.subr.mxu0 0.0
  %564 = vmatpush1.msra.mxu0 0.0
  %565 = vmatprep.mubr.f32.mxu0 0.0
  %566 = vmatmul.mubr.f32.gmra.mrb[0].mxu0 %v500
  %v567 = vpop.f32.mrb[0].mxu0
  %v568 = vadd.f32 0.0, %v567
  %v569 = vpop.f32.mrb[0].mxu0
  %570 = vdwg.mxu0
  %v571 = vmul.f32 %v568, %v568
  %v573 = vrot.slane %v571, 7
  %v575 = vsub.f32 %v568, %v573
  %v576 = vmax.f32 %v575, 0.0
  %v577 = vadd.f32 %v576, 1e-05
  %v578 = vrsqrt.pop %v577
  %v579 = vld [vmem:[%s3] sm:$0x1]
  %v581 = vlaneseq
  %v582 = vshrl.u32 %v581, 7
  %v583 = vsub.s32 0, %v582
  %v584 = vrot.slane %v579, %v583
  %v586 = vmul.f32 %v578, %v584
  %v587 = vld [vmem:[%s4] sm:$0x1]
  %v589 = vrot.slane %v586, 1
  %v591 = vmul.f32 %v568, %v589
  %v592 = vsub.f32 %v587, %v591
  %v593 = vlaneseq
  %v594 = vshrl.u32 %v593, 7
  %v595 = vsub.s32 1, %v594
  %v596 = vrot.slane %v586, %v595
  %v597 = vmul.f32 %v474, %v596
  %v598 = vmul.f32 %v475, %v596
  %v599 = vmul.f32 %v476, %v596
  %v600 = vmul.f32 %v477, %v596
  %v602 = vlaneseq
  %v603 = vshrl.u32 %v602, 7
  %v604 = vsub.s32 0, %v603
  %v605 = vrot.slane %v592, %v604
  %v607 = vadd.f32 %v597, %v605
  %v608 = vadd.f32 %v598, %v605
  %v609 = vadd.f32 %v599, %v605
  %v610 = vadd.f32 %v600, %v605
  %v611 = vmul.f32 %v607, 0.01
  %v612 = vmul.f32 %v608, 0.01
  %v613 = vmul.f32 %v609, 0.01
  %v614 = vmul.f32 %v610, 0.01
  %v615 = vmax.f32 %v607, %v611
  %v616 = vmax.f32 %v608, %v612
  %v617 = vmax.f32 %v609, %v613
  %v618 = vmax.f32 %v610, %v614
  %v619 = vpack.c.bf16 %v616, %v615
  %v620 = vpack.c.bf16 %v618, %v617
  %v621 = vld [vmem:[%s5] sm:$0xf]
  %v622 = vld [vmem:[%s5 + $0x4] sm:$0xf]
  %v623 = vld [vmem:[%s5 + $0x8] sm:$0xf]
  %v624 = vld [vmem:[%s5 + $0xc] sm:$0xf]
  %v625 = vld [vmem:[%s5 + $0x10] sm:$0xf]
  %v626 = vld [vmem:[%s5 + $0x14] sm:$0xf]
  %v627 = vld [vmem:[%s5 + $0x18] sm:$0xf]
  %v628 = vld [vmem:[%s5 + $0x1c] sm:$0xf]
  %v629 = vld [vmem:[%s5 + $0x20] sm:$0xf]
  %v630 = vld [vmem:[%s5 + $0x24] sm:$0xf]
  %v631 = vld [vmem:[%s5 + $0x28] sm:$0xf]
  %v632 = vld [vmem:[%s5 + $0x2c] sm:$0xf]
  %v633 = vld [vmem:[%s5 + $0x30] sm:$0xf]
  %v634 = vld [vmem:[%s5 + $0x34] sm:$0xf]
  %v635 = vld [vmem:[%s5 + $0x38] sm:$0xf]
  %v636 = vld [vmem:[%s5 + $0x3c] sm:$0xf]
  %v653 = vunpack.c.l.b16 %v621
  %v654 = vunpack.c.l.b16 %v622
  %v655 = vunpack.c.l.b16 %v623
  %v656 = vunpack.c.l.b16 %v624
  %v657 = vunpack.c.l.b16 %v625
  %v658 = vunpack.c.l.b16 %v626
  %v659 = vunpack.c.l.b16 %v627
  %v660 = vunpack.c.l.b16 %v628
  %v661 = vunpack.c.l.b16 %v629
  %v662 = vunpack.c.l.b16 %v630
  %v663 = vunpack.c.l.b16 %v631
  %v664 = vunpack.c.l.b16 %v632
  %v665 = vunpack.c.l.b16 %v633
  %v666 = vunpack.c.l.b16 %v634
  %v667 = vunpack.c.l.b16 %v635
  %v668 = vunpack.c.l.b16 %v636
  %v669 = vpack.c.b16 %v654, %v653
  %v670 = vpack.c.b16 %v656, %v655
  %v671 = vpack.c.b16 %v658, %v657
  %v672 = vpack.c.b16 %v660, %v659
  %v673 = vpack.c.b16 %v662, %v661
  %v674 = vpack.c.b16 %v664, %v663
  %v675 = vpack.c.b16 %v666, %v665
  %v676 = vpack.c.b16 %v668, %v667
  %685 = vmatprep.subr.bf16.mxu0 0
  %686 = vmatpush1.bf16.msra.mxu0 %v669
  %687 = vmatprep.subr.bf16.mxu0 0
  %688 = vmatpush1.bf16.msra.mxu0 %v670
  %689 = vmatprep.subr.bf16.mxu0 0
  %690 = vmatpush1.bf16.msra.mxu0 %v671
  %691 = vmatprep.subr.bf16.mxu0 0
  %692 = vmatpush1.bf16.msra.mxu0 %v672
  %693 = vmatprep.subr.bf16.mxu0 0
  %694 = vmatpush1.bf16.msra.mxu0 %v673
  %695 = vmatprep.subr.bf16.mxu0 0
  %696 = vmatpush1.bf16.msra.mxu0 %v674
  %697 = vmatprep.subr.bf16.mxu0 0
  %698 = vmatpush1.bf16.msra.mxu0 %v675
  %699 = vmatprep.subr.bf16.mxu0 0
  %700 = vmatpush1.bf16.msra.mxu0 %v676
  %701 = vmatprep.subr.bf16.mxu0 0
  %702 = vmatpush1.bf16.msra.mxu0 0
  %703 = vmatprep.subr.bf16.mxu0 0
  %704 = vmatpush1.bf16.msra.mxu0 0
  %705 = vmatprep.subr.bf16.mxu0 0
  %706 = vmatpush1.bf16.msra.mxu0 0
  %707 = vmatprep.subr.bf16.mxu0 0
  %708 = vmatpush1.bf16.msra.mxu0 0
  %709 = vmatprep.subr.bf16.mxu0 0
  %710 = vmatpush1.bf16.msra.mxu0 0
  %711 = vmatprep.subr.bf16.mxu0 0
  %712 = vmatpush1.bf16.msra.mxu0 0
  %713 = vmatprep.subr.bf16.mxu0 0
  %714 = vmatpush1.bf16.msra.mxu0 0
  %715 = vmatprep.subr.bf16.mxu0 0
  %716 = vmatpush1.bf16.msra.mxu0 0
  %717 = vmatprep.mubr.bf16.mxu0 0
  %718 = vmatmul.mubr.bf16.gmra.mrb[0].mxu0 %v619
  %v719 = vpop.f32.mrb[0].mxu0
  %v720 = vadd.f32 0.0, %v719
  %v721 = vpop.f32.mrb[0].mxu0
  %v722 = vpop.f32.mrb[0].mxu0
  %v723 = vadd.f32 0.0, %v722
  %v724 = vpop.f32.mrb[0].mxu0
  %725 = vmatprep.mubr.bf16.mxu0 0
  %726 = vmatmul.mubr.bf16.gmra.mrb[0].mxu0 %v620
  %v727 = vpop.f32.mrb[0].mxu0
  %v728 = vadd.f32 0.0, %v727
  %v729 = vpop.f32.mrb[0].mxu0
  %v730 = vpop.f32.mrb[0].mxu0
  %v731 = vadd.f32 0.0, %v730
  %v732 = vpop.f32.mrb[0].mxu0
  %733 = vdwg.mxu0
  %s734 = scalar_lea.vmem %s5, 64
  %v735 = vld [vmem:[%s734] sm:$0xf]
  %v736 = vld [vmem:[%s734 + $0x4] sm:$0xf]
  %v737 = vld [vmem:[%s734 + $0x8] sm:$0xf]
  %v738 = vld [vmem:[%s734 + $0xc] sm:$0xf]
  %v739 = vld [vmem:[%s734 + $0x10] sm:$0xf]
  %v740 = vld [vmem:[%s734 + $0x14] sm:$0xf]
  %v741 = vld [vmem:[%s734 + $0x18] sm:$0xf]
  %v742 = vld [vmem:[%s734 + $0x1c] sm:$0xf]
  %v743 = vld [vmem:[%s734 + $0x20] sm:$0xf]
  %v744 = vld [vmem:[%s734 + $0x24] sm:$0xf]
  %v745 = vld [vmem:[%s734 + $0x28] sm:$0xf]
  %v746 = vld [vmem:[%s734 + $0x2c] sm:$0xf]
  %v747 = vld [vmem:[%s734 + $0x30] sm:$0xf]
  %v748 = vld [vmem:[%s734 + $0x34] sm:$0xf]
  %v749 = vld [vmem:[%s734 + $0x38] sm:$0xf]
  %v750 = vld [vmem:[%s734 + $0x3c] sm:$0xf]
  %s751 = scalar_lea.vmem %s5, 128
  %v752 = vld [vmem:[%s751] sm:$0xf]
  %v753 = vld [vmem:[%s751 + $0x4] sm:$0xf]
  %v754 = vld [vmem:[%s751 + $0x8] sm:$0xf]
  %v755 = vld [vmem:[%s751 + $0xc] sm:$0xf]
  %v756 = vld [vmem:[%s751 + $0x10] sm:$0xf]
  %v757 = vld [vmem:[%s751 + $0x14] sm:$0xf]
  %v758 = vld [vmem:[%s751 + $0x18] sm:$0xf]
  %v759 = vld [vmem:[%s751 + $0x1c] sm:$0xf]
  %v760 = vld [vmem:[%s751 + $0x20] sm:$0xf]
  %v761 = vld [vmem:[%s751 + $0x24] sm:$0xf]
  %v762 = vld [vmem:[%s751 + $0x28] sm:$0xf]
  %v763 = vld [vmem:[%s751 + $0x2c] sm:$0xf]
  %v764 = vld [vmem:[%s751 + $0x30] sm:$0xf]
  %v765 = vld [vmem:[%s751 + $0x34] sm:$0xf]
  %v766 = vld [vmem:[%s751 + $0x38] sm:$0xf]
  %v767 = vld [vmem:[%s751 + $0x3c] sm:$0xf]
  %v784 = vunpack.c.l.b16 %v752
  %v785 = vunpack.c.l.b16 %v753
  %v786 = vunpack.c.l.b16 %v754
  %v787 = vunpack.c.l.b16 %v755
  %v788 = vunpack.c.l.b16 %v756
  %v789 = vunpack.c.l.b16 %v757
  %v790 = vunpack.c.l.b16 %v758
  %v791 = vunpack.c.l.b16 %v759
  %v792 = vunpack.c.l.b16 %v760
  %v793 = vunpack.c.l.b16 %v761
  %v794 = vunpack.c.l.b16 %v762
  %v795 = vunpack.c.l.b16 %v763
  %v796 = vunpack.c.l.b16 %v764
  %v797 = vunpack.c.l.b16 %v765
  %v798 = vunpack.c.l.b16 %v766
  %v799 = vunpack.c.l.b16 %v767
  %v800 = vpack.c.b16 %v785, %v784
  %v801 = vpack.c.b16 %v787, %v786
  %v802 = vpack.c.b16 %v789, %v788
  %v803 = vpack.c.b16 %v791, %v790
  %v804 = vpack.c.b16 %v793, %v792
  %v805 = vpack.c.b16 %v795, %v794
  %v806 = vpack.c.b16 %v797, %v796
  %v807 = vpack.c.b16 %v799, %v798
  %816 = vmatprep.subr.bf16.mxu0 0
  %817 = vmatpush1.bf16.msra.mxu0 %v800
  %818 = vmatprep.subr.bf16.mxu0 0
  %819 = vmatpush1.bf16.msra.mxu0 %v801
  %820 = vmatprep.subr.bf16.mxu0 0
  %821 = vmatpush1.bf16.msra.mxu0 %v802
  %822 = vmatprep.subr.bf16.mxu0 0
  %823 = vmatpush1.bf16.msra.mxu0 %v803
  %824 = vmatprep.subr.bf16.mxu0 0
  %825 = vmatpush1.bf16.msra.mxu0 %v804
  %826 = vmatprep.subr.bf16.mxu0 0
  %827 = vmatpush1.bf16.msra.mxu0 %v805
  %828 = vmatprep.subr.bf16.mxu0 0
  %829 = vmatpush1.bf16.msra.mxu0 %v806
  %830 = vmatprep.subr.bf16.mxu0 0
  %831 = vmatpush1.bf16.msra.mxu0 %v807
  %832 = vmatprep.subr.bf16.mxu0 0
  %833 = vmatpush1.bf16.msra.mxu0 0
  %834 = vmatprep.subr.bf16.mxu0 0
  %835 = vmatpush1.bf16.msra.mxu0 0
  %836 = vmatprep.subr.bf16.mxu0 0
  %837 = vmatpush1.bf16.msra.mxu0 0
  %838 = vmatprep.subr.bf16.mxu0 0
  %839 = vmatpush1.bf16.msra.mxu0 0
  %840 = vmatprep.subr.bf16.mxu0 0
  %841 = vmatpush1.bf16.msra.mxu0 0
  %842 = vmatprep.subr.bf16.mxu0 0
  %843 = vmatpush1.bf16.msra.mxu0 0
  %844 = vmatprep.subr.bf16.mxu0 0
  %845 = vmatpush1.bf16.msra.mxu0 0
  %846 = vmatprep.subr.bf16.mxu0 0
  %847 = vmatpush1.bf16.msra.mxu0 0
  %848 = vmatprep.mubr.bf16.mxu0 0
  %849 = vmatmul.mubr.bf16.gmra.mrb[0].mxu0 %v619
  %v850 = vpop.f32.mrb[0].mxu0
  %v851 = vadd.f32 0.0, %v850
  %v852 = vpop.f32.mrb[0].mxu0
  %v853 = vpop.f32.mrb[0].mxu0
  %v854 = vadd.f32 0.0, %v853
  %v855 = vpop.f32.mrb[0].mxu0
  %856 = vmatprep.mubr.bf16.mxu0 0
  %857 = vmatmul.mubr.bf16.gmra.mrb[0].mxu0 %v620
  %v858 = vpop.f32.mrb[0].mxu0
  %v859 = vadd.f32 0.0, %v858
  %v860 = vpop.f32.mrb[0].mxu0
  %v861 = vpop.f32.mrb[0].mxu0
  %v862 = vadd.f32 0.0, %v861
  %v863 = vpop.f32.mrb[0].mxu0
  %864 = vdwg.mxu0
  %v869 = vrot.slane %v720, 7
  %v870 = vrot.slane %v723, 7
  %v871 = vsel %vm339, %v869, %v870
  %v872 = vrot.slane %v728, 7
  %v873 = vsel %vm339, %v870, %v872
  %v874 = vrot.slane %v731, 7
  %v875 = vsel %vm339, %v872, %v874
  %v880 = vsel %vm339, 0.0, %v869
  %v881 = vsel %vm47, %v880, 0.0
  %v882 = vsel %vm48, %v871, 0.0
  %v883 = vsel %vm49, %v873, 0.0
  %v884 = vsel %vm50, %v875, 0.0
  %v901 = vunpack.c.l.b16 %v735
  %v902 = vunpack.c.l.b16 %v736
  %v903 = vunpack.c.l.b16 %v737
  %v904 = vunpack.c.l.b16 %v738
  %v905 = vunpack.c.l.b16 %v739
  %v906 = vunpack.c.l.b16 %v740
  %v907 = vunpack.c.l.b16 %v741
  %v908 = vunpack.c.l.b16 %v742
  %v909 = vunpack.c.l.b16 %v743
  %v910 = vunpack.c.l.b16 %v744
  %v911 = vunpack.c.l.b16 %v745
  %v912 = vunpack.c.l.b16 %v746
  %v913 = vunpack.c.l.b16 %v747
  %v914 = vunpack.c.l.b16 %v748
  %v915 = vunpack.c.l.b16 %v749
  %v916 = vunpack.c.l.b16 %v750
  %v917 = vpack.c.b16 %v902, %v901
  %v918 = vpack.c.b16 %v904, %v903
  %v919 = vpack.c.b16 %v906, %v905
  %v920 = vpack.c.b16 %v908, %v907
  %v921 = vpack.c.b16 %v910, %v909
  %v922 = vpack.c.b16 %v912, %v911
  %v923 = vpack.c.b16 %v914, %v913
  %v924 = vpack.c.b16 %v916, %v915
  %933 = vmatprep.subr.bf16.mxu0 0
  %934 = vmatpush1.bf16.msra.mxu0 %v917
  %935 = vmatprep.subr.bf16.mxu0 0
  %936 = vmatpush1.bf16.msra.mxu0 %v918
  %937 = vmatprep.subr.bf16.mxu0 0
  %938 = vmatpush1.bf16.msra.mxu0 %v919
  %939 = vmatprep.subr.bf16.mxu0 0
  %940 = vmatpush1.bf16.msra.mxu0 %v920
  %941 = vmatprep.subr.bf16.mxu0 0
  %942 = vmatpush1.bf16.msra.mxu0 %v921
  %943 = vmatprep.subr.bf16.mxu0 0
  %944 = vmatpush1.bf16.msra.mxu0 %v922
  %945 = vmatprep.subr.bf16.mxu0 0
  %946 = vmatpush1.bf16.msra.mxu0 %v923
  %947 = vmatprep.subr.bf16.mxu0 0
  %948 = vmatpush1.bf16.msra.mxu0 %v924
  %949 = vmatprep.subr.bf16.mxu0 0
  %950 = vmatpush1.bf16.msra.mxu0 0
  %951 = vmatprep.subr.bf16.mxu0 0
  %952 = vmatpush1.bf16.msra.mxu0 0
  %953 = vmatprep.subr.bf16.mxu0 0
  %954 = vmatpush1.bf16.msra.mxu0 0
  %955 = vmatprep.subr.bf16.mxu0 0
  %956 = vmatpush1.bf16.msra.mxu0 0
  %957 = vmatprep.subr.bf16.mxu0 0
  %958 = vmatpush1.bf16.msra.mxu0 0
  %959 = vmatprep.subr.bf16.mxu0 0
  %960 = vmatpush1.bf16.msra.mxu0 0
  %961 = vmatprep.subr.bf16.mxu0 0
  %962 = vmatpush1.bf16.msra.mxu0 0
  %963 = vmatprep.subr.bf16.mxu0 0
  %964 = vmatpush1.bf16.msra.mxu0 0
  %965 = vmatprep.mubr.bf16.mxu0 0
  %966 = vmatmul.mubr.bf16.gmra.mrb[0].mxu0 %v619
  %v967 = vpop.f32.mrb[0].mxu0
  %v968 = vadd.f32 %v881, %v967
  %v969 = vpop.f32.mrb[0].mxu0
  %v970 = vpop.f32.mrb[0].mxu0
  %v971 = vadd.f32 %v882, %v970
  %v972 = vpop.f32.mrb[0].mxu0
  %973 = vmatprep.mubr.bf16.mxu0 0
  %974 = vmatmul.mubr.bf16.gmra.mrb[0].mxu0 %v620
  %v975 = vpop.f32.mrb[0].mxu0
  %v976 = vadd.f32 %v883, %v975
  %v977 = vpop.f32.mrb[0].mxu0
  %v978 = vpop.f32.mrb[0].mxu0
  %v979 = vadd.f32 %v884, %v978
  %v980 = vpop.f32.mrb[0].mxu0
  %981 = vdwg.mxu0
  %v986 = vrot.slane %v851, 1
  %v987 = vrot.slane %v854, 1
  %v988 = vsel %vm457, %v986, %v987
  %v989 = vrot.slane %v859, 1
  %v990 = vsel %vm457, %v987, %v989
  %v991 = vrot.slane %v862, 1
  %v992 = vsel %vm457, %v989, %v991
  %v997 = vsel %vm457, %v991, 0.0
  %v998 = vsel %vm55, %v988, 0.0
  %v999 = vsel %vm56, %v990, 0.0
  %v1000 = vsel %vm57, %v992, 0.0
  %v1001 = vsel %vm58, %v997, 0.0
  %v1002 = vadd.f32 %v968, %v998
  %v1003 = vadd.f32 %v971, %v999
  %v1004 = vadd.f32 %v976, %v1000
  %v1005 = vadd.f32 %v979, %v1001
  %v1006 = vadd.f32 %v1002, %v1003
  %v1007 = vadd.f32 %v1006, %v1004
  %v1008 = vadd.f32 %v1007, %v1005
  %v1009 = vrot.slane %v1008, 4
  %v1010 = vadd.f32 %v1008, %v1009
  %v1011 = vrot.slane %v1010, 2
  %v1012 = vadd.f32 %v1010, %v1011
  %v1013 = vrot.slane %v1012, 1
  %v1014 = vadd.f32 %v1012, %v1013
  %v1015 = vmul.f32 %v1002, %v1002
  %v1016 = vmul.f32 %v1003, %v1003
  %v1017 = vmul.f32 %v1004, %v1004
  %v1018 = vmul.f32 %v1005, %v1005
  %v1019 = vadd.f32 %v1015, %v1016
  %v1020 = vadd.f32 %v1019, %v1017
  %v1021 = vadd.f32 %v1020, %v1018
  %v1022 = vrot.slane %v1021, 4
  %v1023 = vadd.f32 %v1021, %v1022
  %v1024 = vrot.slane %v1023, 2
  %v1025 = vadd.f32 %v1023, %v1024
  %v1026 = vrot.slane %v1025, 1
  %v1027 = vadd.f32 %v1025, %v1026
  %v1028 = vsel %vm339, %v1014, %v1027
  %1029 = vmatprep.subr.mxu0 0.0
  %1030 = vmatpush1.msra.mxu0 %v59
  %1031 = vmatprep.subr.mxu0 0.0
  %1032 = vmatpush1.msra.mxu0 %v60
  %1033 = vmatprep.subr.mxu0 0.0
  %1034 = vmatpush1.msra.mxu0 %v61
  %1035 = vmatprep.subr.mxu0 0.0
  %1036 = vmatpush1.msra.mxu0 %v62
  %1037 = vmatprep.subr.mxu0 0.0
  %1038 = vmatpush1.msra.mxu0 %v63
  %1039 = vmatprep.subr.mxu0 0.0
  %1040 = vmatpush1.msra.mxu0 %v64
  %1041 = vmatprep.subr.mxu0 0.0
  %1042 = vmatpush1.msra.mxu0 %v65
  %1043 = vmatprep.subr.mxu0 0.0
  %1044 = vmatpush1.msra.mxu0 %v66
  %1045 = vmatprep.subr.mxu0 0.0
  %1046 = vmatpush1.msra.mxu0 %v67
  %1047 = vmatprep.subr.mxu0 0.0
  %1048 = vmatpush1.msra.mxu0 %v68
  %1049 = vmatprep.subr.mxu0 0.0
  %1050 = vmatpush1.msra.mxu0 %v69
  %1051 = vmatprep.subr.mxu0 0.0
  %1052 = vmatpush1.msra.mxu0 %v70
  %1053 = vmatprep.subr.mxu0 0.0
  %1054 = vmatpush1.msra.mxu0 %v71
  %1055 = vmatprep.subr.mxu0 0.0
  %1056 = vmatpush1.msra.mxu0 %v72
  %1057 = vmatprep.subr.mxu0 0.0
  %1058 = vmatpush1.msra.mxu0 %v73
  %1059 = vmatprep.subr.mxu0 0.0
  %1060 = vmatpush1.msra.mxu0 %v74
  %1061 = vmatprep.subr.mxu0 0.0
  %1062 = vmatpush1.msra.mxu0 0.0
  %1063 = vmatprep.subr.mxu0 0.0
  %1064 = vmatpush1.msra.mxu0 0.0
  %1065 = vmatprep.subr.mxu0 0.0
  %1066 = vmatpush1.msra.mxu0 0.0
  %1067 = vmatprep.subr.mxu0 0.0
  %1068 = vmatpush1.msra.mxu0 0.0
  %1069 = vmatprep.subr.mxu0 0.0
  %1070 = vmatpush1.msra.mxu0 0.0
  %1071 = vmatprep.subr.mxu0 0.0
  %1072 = vmatpush1.msra.mxu0 0.0
  %1073 = vmatprep.subr.mxu0 0.0
  %1074 = vmatpush1.msra.mxu0 0.0
  %1075 = vmatprep.subr.mxu0 0.0
  %1076 = vmatpush1.msra.mxu0 0.0
  %1077 = vmatprep.subr.mxu0 0.0
  %1078 = vmatpush1.msra.mxu0 0.0
  %1079 = vmatprep.subr.mxu0 0.0
  %1080 = vmatpush1.msra.mxu0 0.0
  %1081 = vmatprep.subr.mxu0 0.0
  %1082 = vmatpush1.msra.mxu0 0.0
  %1083 = vmatprep.subr.mxu0 0.0
  %1084 = vmatpush1.msra.mxu0 0.0
  %1085 = vmatprep.subr.mxu0 0.0
  %1086 = vmatpush1.msra.mxu0 0.0
  %1087 = vmatprep.subr.mxu0 0.0
  %1088 = vmatpush1.msra.mxu0 0.0
  %1089 = vmatprep.subr.mxu0 0.0
  %1090 = vmatpush1.msra.mxu0 0.0
  %1091 = vmatprep.subr.mxu0 0.0
  %1092 = vmatpush1.msra.mxu0 0.0
  %1093 = vmatprep.mubr.f32.mxu0 0.0
  %1094 = vmatmul.mubr.f32.gmra.mrb[0].mxu0 %v1028
  %v1095 = vpop.f32.mrb[0].mxu0
  %v1096 = vadd.f32 0.0, %v1095
  %v1097 = vpop.f32.mrb[0].mxu0
  %1098 = vdwg.mxu0
  %v1099 = vmul.f32 %v1096, %v1096
  %v1101 = vrot.slane %v1099, 7
  %v1103 = vsub.f32 %v1096, %v1101
  %v1104 = vmax.f32 %v1103, 0.0
  %v1105 = vadd.f32 %v1104, 1e-05
  %v1106 = vrsqrt.pop %v1105
  %v1107 = vld [vmem:[%s6] sm:$0x1]
  %v1109 = vlaneseq
  %v1110 = vshrl.u32 %v1109, 7
  %v1111 = vsub.s32 0, %v1110
  %v1112 = vrot.slane %v1107, %v1111
  %v1114 = vmul.f32 %v1106, %v1112
  %v1115 = vld [vmem:[%s7] sm:$0x1]
  %v1117 = vrot.slane %v1114, 1
  %v1119 = vmul.f32 %v1096, %v1117
  %v1120 = vsub.f32 %v1115, %v1119
  %v1121 = vlaneseq
  %v1122 = vshrl.u32 %v1121, 7
  %v1123 = vsub.s32 1, %v1122
  %v1124 = vrot.slane %v1114, %v1123
  %v1125 = vmul.f32 %v1002, %v1124
  %v1126 = vmul.f32 %v1003, %v1124
  %v1127 = vmul.f32 %v1004, %v1124
  %v1128 = vmul.f32 %v1005, %v1124
  %v1130 = vlaneseq
  %v1131 = vshrl.u32 %v1130, 7
  %v1132 = vsub.s32 0, %v1131
  %v1133 = vrot.slane %v1120, %v1132
  %v1135 = vadd.f32 %v1125, %v1133
  %v1136 = vadd.f32 %v1126, %v1133
  %v1137 = vadd.f32 %v1127, %v1133
  %v1138 = vadd.f32 %v1128, %v1133
  %v1139 = vmul.f32 %v1135, 0.01
  %v1140 = vmul.f32 %v1136, 0.01
  %v1141 = vmul.f32 %v1137, 0.01
  %v1142 = vmul.f32 %v1138, 0.01
  %v1143 = vmax.f32 %v1135, %v1139
  %v1144 = vmax.f32 %v1136, %v1140
  %v1145 = vmax.f32 %v1137, %v1141
  %v1146 = vmax.f32 %v1138, %v1142
  %1147 = vst [vmem:[%s8] sm:$0xff] %v1143
  %1148 = vst [vmem:[%s8 + $0x8] sm:$0xff] %v1144
  %1149 = vst [vmem:[%s8 + $0x10] sm:$0xff] %v1145
  %1150 = vst [vmem:[%s8 + $0x18] sm:$0xff] %v1146
  // Predicated region
  $region34: #{stacked_conv_layers_forward.1} parent=0 // pred_check
    _
  $region35: #{stacked_conv_layers_forward.1} parent=0 // pred_check_branch
    %1152 = sbr.rel (0) target = $region37
  $region36: #{stacked_conv_layers_forward.1} parent=0 // pred_region
    _
  $region37: #{stacked_conv_layers_forward.1} parent=0 // pred_fallthru
    _
  // Predicated region
  $region38: #{stacked_conv_layers_forward.1} parent=0 // pred_check
    _
  $region39: #{stacked_conv_layers_forward.1} parent=0 // pred_check_branch
    %1154 = sbr.rel (0) target = $region41
  $region40: #{stacked_conv_layers_forward.1} parent=0 // pred_region
    _
  $region41: #{stacked_conv_layers_forward.1} parent=0 // pred_fallthru
    _

</llo_original>
